<compile_context>
chip_gen: v5e
topology: v5e:2x2
jax: 0.10.0
libtpu: 0.0.40
codegen_flags: <defaults>
</compile_context>

<pallas_src>
import jax
import jax.numpy as jnp
from jax.experimental import pallas as pl
from jax.experimental.pallas import tpu as pltpu

BN_EPS = 1e-5
_GELU_C0 = 0.044715
_GELU_C1 = 0.7978845608028654


def _gelu_chain(v2):
    # Exact elementwise graph from the PyTorch module.
    v3 = v2 * 0.5
    v4 = v2 * v2
    v5 = v4 * v2
    v6 = v5 * _GELU_C0
    v7 = v2 + v6
    v8 = v7 * _GELU_C1
    v9 = jnp.tanh(v8)
    v10 = v9 + 1.0
    return v3 * v10


# ---------------------------------------------------------------------------
# Fused single-launch kernel (small / medium problems; everything in VMEM).
# ---------------------------------------------------------------------------
def _fused_kernel(x_ref, w_ref, b_ref, gamma_ref, beta_ref, o_ref):
    # x_ref: (N, Cin, L)  w_ref: (Cout, Cin)  b/gamma/beta: (Cout, 1)
    # o_ref: (N, Cout, L) -- also used as VMEM staging for the conv output v1.
    n_batch = x_ref.shape[0]
    m = n_batch * x_ref.shape[2]
    w = w_ref[...]
    b = b_ref[...]

    # Pass A: conv (1x1 == matmul) + per-channel sum.
    s = jnp.zeros_like(b)
    for n in range(n_batch):
        v1 = jnp.dot(w, x_ref[n], preferred_element_type=jnp.float32) + b
        o_ref[n] = v1
        s = s + jnp.sum(v1, axis=1, keepdims=True)
    mean = s * (1.0 / m)

    # Pass B: exact (two-pass) biased variance -- no E[v^2]-mean^2 cancellation.
    ss = jnp.zeros_like(b)
    for n in range(n_batch):
        d = o_ref[n] - mean
        ss = ss + jnp.sum(d * d, axis=1, keepdims=True)
    var = ss * (1.0 / m)

    invstd = jax.lax.rsqrt(var + BN_EPS)
    scale = gamma_ref[...] * invstd
    shift = beta_ref[...] - mean * scale

    # Pass C: BN affine + tanh-GELU chain.
    for n in range(n_batch):
        v2 = o_ref[n] * scale + shift
        o_ref[n] = _gelu_chain(v2)


# ---------------------------------------------------------------------------
# Tiled two-pass kernels (large problems).
# ---------------------------------------------------------------------------
def _stats_kernel(x_ref, sx_ref, gram_ref):
    # x_ref: (Cin, TL); sx_ref: (Cin, 1); gram_ref: (Cin, Cin)
    # Accumulators are per-batch (grid axis 0), reduced over L tiles (axis 1).
    @pl.when(pl.program_id(1) == 0)
    def _():
        sx_ref[...] = jnp.zeros_like(sx_ref)
        gram_ref[...] = jnp.zeros_like(gram_ref)

    x = x_ref[...]
    sx_ref[...] += jnp.sum(x, axis=1, keepdims=True)
    gram_ref[...] += jnp.einsum("cl,dl->cd", x, x,
                                preferred_element_type=jnp.float32)


def _apply_kernel(x_ref, wf_ref, bf_ref, o_ref):
    # BN already folded into wf / bf on the host side.
    v2 = jnp.dot(wf_ref[...], x_ref[...],
                 preferred_element_type=jnp.float32) + bf_ref[...]
    o_ref[...] = _gelu_chain(v2)


def _round_up(v, m):
    return ((v + m - 1) // m) * m


def conv_bn_gelu(x_nchw, w, b, gamma, beta, *, force_tiled=False, max_l_tile=8192):
    """x_nchw: (N, Cin, H, W); w: (Cout, Cin); b, gamma, beta: (Cout,)."""
    N, Cin, H, W = x_nchw.shape
    Cout = w.shape[0]
    L = H * W
    M = N * L

    x = x_nchw.reshape(N, Cin, L)                    # free reshape, lane-dense
    w = w.astype(jnp.float32)
    b_c = b.reshape(Cout, 1).astype(jnp.float32)
    gamma_c = gamma.reshape(Cout, 1).astype(jnp.float32)
    beta_c = beta.reshape(Cout, 1).astype(jnp.float32)

    ew_flops = 10  # approx elementwise flops / output element in the GELU chain

    # ----------------- fused single-launch path -----------------
    fused_vmem_est = 4 * (N * Cin * L + N * Cout * L + 2 * Cout * L)
    if not force_tiled and N <= 16 and fused_vmem_est <= 20 * 1024 * 1024:
        cost = pl.CostEstimate(
            flops=int(2 * M * Cout * Cin + (ew_flops + 6) * M * Cout),
            transcendentals=int(M * Cout),
            bytes_accessed=int(4 * (N * Cin * L + N * Cout * L + Cout * (Cin + 3))),
        )
        out = pl.pallas_call(
            _fused_kernel,
            out_shape=jax.ShapeDtypeStruct((N, Cout, L), jnp.float32),
            grid=(1,),
            in_specs=[
                pl.BlockSpec((N, Cin, L), lambda i: (0, 0, 0)),
                pl.BlockSpec((Cout, Cin), lambda i: (0, 0)),
                pl.BlockSpec((Cout, 1), lambda i: (0, 0)),
                pl.BlockSpec((Cout, 1), lambda i: (0, 0)),
                pl.BlockSpec((Cout, 1), lambda i: (0, 0)),
            ],
            out_specs=pl.BlockSpec((N, Cout, L), lambda i: (0, 0, 0)),
            compiler_params=pltpu.CompilerParams(
                dimension_semantics=("arbitrary",),
                vmem_limit_bytes=48 * 1024 * 1024),
            cost_estimate=cost,
        )(x, w, b_c, gamma_c, beta_c)
        return out.reshape(N, Cout, H, W)

    # ----------------- tiled two-pass path -----------------
    tl = max(128, (min(max_l_tile, _round_up(L, 128)) // 128) * 128)
    Lp = _round_up(L, tl)
    if Lp != L:
        # Zero-padding is exact for the x statistics below (zeros add nothing to
        # the sum / Gram; the true element count M is used in the finalize).
        x = jnp.pad(x, ((0, 0), (0, 0), (0, Lp - L)))
    n_l = Lp // tl
    grid = (N, n_l)

    x_spec = pl.BlockSpec((None, Cin, tl), lambda n, l: (n, 0, l))

    # Pass 1: per-batch partial sum(x) and Gram(x) (batch axis "parallel" so v7x
    # can shard it across TensorCores; L reduction is "arbitrary").
    stats_cost = pl.CostEstimate(
        flops=int(2 * N * Lp * Cin * Cin + N * Lp * Cin),
        transcendentals=0,
        bytes_accessed=int(4 * (N * Cin * Lp + N * Cin * (Cin + 1))),
    )
    sx_p, gram_p = pl.pallas_call(
        _stats_kernel,
        out_shape=(jax.ShapeDtypeStruct((N, Cin, 1), jnp.float32),
                   jax.ShapeDtypeStruct((N, Cin, Cin), jnp.float32)),
        grid=grid,
        in_specs=[x_spec],
        out_specs=(pl.BlockSpec((None, Cin, 1), lambda n, l: (n, 0, 0)),
                   pl.BlockSpec((None, Cin, Cin), lambda n, l: (n, 0, 0))),
        compiler_params=pltpu.CompilerParams(
            dimension_semantics=("parallel", "arbitrary"),
            vmem_limit_bytes=32 * 1024 * 1024),
        cost_estimate=stats_cost,
    )(x)

    # Tiny XLA finalize: stats of v1 = W x + b from the x stats, then fold BN
    # affine into the conv weight/bias for pass 2.
    hi = jax.lax.Precision.HIGHEST
    sx = jnp.sum(sx_p, axis=0)                       # (Cin, 1)
    gram = jnp.sum(gram_p, axis=0)                   # (Cin, Cin)
    wsx = jnp.dot(w, sx, precision=hi)               # (Cout, 1)
    sum_v = wsx + M * b_c
    wg = jnp.dot(w, gram, precision=hi)              # (Cout, Cin)
    diag = jnp.sum(wg * w, axis=1, keepdims=True)    # diag(W G W^T)
    ssq_v = diag + 2.0 * b_c * wsx + M * (b_c * b_c)
    mean = sum_v / M
    var = ssq_v / M - mean * mean                    # biased var (training-mode BN)
    invstd = jax.lax.rsqrt(var + BN_EPS)
    scale = gamma_c * invstd
    shift = beta_c - mean * scale
    w_f = scale * w                                  # BN folded into conv weight
    b_f = shift + scale * b_c                        # BN folded into conv bias

    # Pass 2: conv with folded BN + GELU; fully parallel, lane-dense stores.
    apply_cost = pl.CostEstimate(
        flops=int(2 * N * Lp * Cout * Cin + ew_flops * N * Lp * Cout),
        transcendentals=int(N * Lp * Cout),
        bytes_accessed=int(4 * (N * Cin * Lp + N * Cout * Lp)),
    )
    out = pl.pallas_call(
        _apply_kernel,
        out_shape=jax.ShapeDtypeStruct((N, Cout, Lp), jnp.float32),
        grid=grid,
        in_specs=[x_spec,
                  pl.BlockSpec((Cout, Cin), lambda n, l: (0, 0)),
                  pl.BlockSpec((Cout, 1), lambda n, l: (0, 0))],
        out_specs=pl.BlockSpec((None, Cout, tl), lambda n, l: (n, 0, l)),
        compiler_params=pltpu.CompilerParams(
            dimension_semantics=("parallel", "parallel"),
            vmem_limit_bytes=32 * 1024 * 1024),
        cost_estimate=apply_cost,
    )(x, w_f, b_f)

    if Lp != L:
        out = out[:, :, :L]
    return out.reshape(N, Cout, H, W)


def _reference(x, w, b, gamma, beta):
    Cout = w.shape[0]
    v1 = jnp.einsum("oc,nchw->nohw", w, x,
                    precision=jax.lax.Precision.HIGHEST) + b.reshape(1, Cout, 1, 1)
    mean = jnp.mean(v1, axis=(0, 2, 3), keepdims=True)
    var = jnp.mean((v1 - mean) ** 2, axis=(0, 2, 3), keepdims=True)
    v2 = (v1 - mean) * jax.lax.rsqrt(var + BN_EPS) \
        * gamma.reshape(1, Cout, 1, 1) + beta.reshape(1, Cout, 1, 1)
    v3 = v2 * 0.5
    v7 = v2 + v2 * v2 * v2 * _GELU_C0
    v9 = jnp.tanh(v7 * _GELU_C1)
    return v3 * (v9 + 1.0)


if __name__ == "__main__":
    key = jax.random.PRNGKey(0)
    kx, kw, kb, kg, kbt, kx2 = jax.random.split(key, 6)

    # Small shapes consistent with the module: Conv2d(8 -> 64, kernel 1x1).
    N, Cin, H, W = 2, 8, 16, 16
    Cout = 64

    x = jax.random.normal(kx, (N, Cin, H, W), dtype=jnp.float32)
    w = jax.random.normal(kw, (Cout, Cin), dtype=jnp.float32) / jnp.sqrt(Cin)
    b = jax.random.normal(kb, (Cout,), dtype=jnp.float32) * 0.1
    gamma = 1.0 + 0.1 * jax.random.normal(kg, (Cout,), dtype=jnp.float32)
    beta = 0.05 * jax.random.normal(kbt, (Cout,), dtype=jnp.float32)

    ref = _reference(x, w, b, gamma, beta)

    # Fused single-launch path (also the path taken at the module's real shape).
    out_fused = conv_bn_gelu(x, w, b, gamma, beta)
    jax.block_until_ready(out_fused)
    assert out_fused.shape == (N, Cout, H, W)
    assert jnp.allclose(out_fused, ref, atol=2e-2, rtol=2e-2), "fused path mismatch"

    # Tiled two-pass path, forced with a small L tile so multi-tile accumulation
    # and the folded-BN apply kernel are exercised.
    out_tiled = conv_bn_gelu(x, w, b, gamma, beta, force_tiled=True, max_l_tile=128)
    jax.block_until_ready(out_tiled)
    assert jnp.allclose(out_tiled, ref, atol=2e-2, rtol=2e-2), "tiled path mismatch"

    # Ragged spatial extent (L not a multiple of 128) through the tiled path.
    x3 = jax.random.normal(kx2, (1, Cin, 15, 12), dtype=jnp.float32)
    ref3 = _reference(x3, w, b, gamma, beta)
    out3 = conv_bn_gelu(x3, w, b, gamma, beta, force_tiled=True, max_l_tile=128)
    jax.block_until_ready(out3)
    assert jnp.allclose(out3, ref3, atol=2e-2, rtol=2e-2), "ragged tiled path mismatch"

    print("KERNEL_OK")
</pallas_src>

<mosaic_0001>
module attributes {stable_mosaic.version = 11 : i64} {
  func.func @_fused_kernel(%arg0: i32, %arg1: memref<2x8x256xf32, #tpu.memory_space<vmem>>, %arg2: memref<64x8xf32, #tpu.memory_space<vmem>>, %arg3: memref<64x1xf32, #tpu.memory_space<vmem>>, %arg4: memref<64x1xf32, #tpu.memory_space<vmem>>, %arg5: memref<64x1xf32, #tpu.memory_space<vmem>>, %arg6: memref<2x64x256xf32, #tpu.memory_space<vmem>>) attributes {dimension_semantics = [#tpu.dimension_semantics<arbitrary>], iteration_bounds = array<i64: 1>, scalar_prefetch = 0 : i64, scratch_operands = 0 : i64, tpu.core_type = #tpu.core_type<tc>, window_params = [{pipeline_mode = #tpu.pipeline_mode<synchronous>, transform_indices = @transform_0, window_bounds = array<i64: 2, 8, 256>}, {pipeline_mode = #tpu.pipeline_mode<synchronous>, transform_indices = @transform_1, window_bounds = array<i64: 64, 8>}, {pipeline_mode = #tpu.pipeline_mode<synchronous>, transform_indices = @transform_2, window_bounds = array<i64: 64, 1>}, {pipeline_mode = #tpu.pipeline_mode<synchronous>, transform_indices = @transform_3, window_bounds = array<i64: 64, 1>}, {pipeline_mode = #tpu.pipeline_mode<synchronous>, transform_indices = @transform_4, window_bounds = array<i64: 64, 1>}, {pipeline_mode = #tpu.pipeline_mode<synchronous>, transform_indices = @transform_5, window_bounds = array<i64: 2, 64, 256>}]} {
    %c0 = arith.constant 0 : index
    %c0_0 = arith.constant 0 : index
    %0 = vector.load %arg2[%c0, %c0_0] : memref<64x8xf32, #tpu.memory_space<vmem>>, vector<64x8xf32>
    %c0_1 = arith.constant 0 : index
    %c0_2 = arith.constant 0 : index
    %1 = vector.load %arg3[%c0_1, %c0_2] : memref<64x1xf32, #tpu.memory_space<vmem>>, vector<64x1xf32>
    %cst = arith.constant 0.000000e+00 : f32
    %2 = vector.broadcast %cst : f32 to vector<64x1xf32>
    %c0_3 = arith.constant 0 : index
    %c0_4 = arith.constant 0 : index
    %c0_5 = arith.constant 0 : index
    %3 = vector.load %arg1[%c0_3, %c0_4, %c0_5] : memref<2x8x256xf32, #tpu.memory_space<vmem>>, vector<1x8x256xf32>
    %4 = vector.shape_cast %3 : vector<1x8x256xf32> to vector<8x256xf32>
    %cst_6 = arith.constant dense<0.000000e+00> : vector<64x256xf32>
    %5 = tpu.matmul %0, %4, %cst_6 {dimension_numbers = #tpu.dot_dimension_numbers<[1], [0], [0], [1], [0, 0, 1, 1], [], []>} : vector<64x8xf32>, vector<8x256xf32>, vector<64x256xf32> -> vector<64x256xf32>
    %6 = vector.broadcast %1 : vector<64x1xf32> to vector<64x256xf32>
    %7 = arith.addf %5, %6 : vector<64x256xf32>
    %c0_7 = arith.constant 0 : index
    %c0_8 = arith.constant 0 : index
    %c0_9 = arith.constant 0 : index
    %8 = vector.load %arg6[%c0_7, %c0_8, %c0_9] : memref<2x64x256xf32, #tpu.memory_space<vmem>>, vector<1x64x256xf32>
    %9 = vector.shape_cast %8 : vector<1x64x256xf32> to vector<64x256xf32>
    %10 = vector.shape_cast %7 : vector<64x256xf32> to vector<1x64x256xf32>
    tpu.vector_store %arg6[%c0_7, %c0_8, %c0_9], %10 {strides = array<i32>} : memref<2x64x256xf32, #tpu.memory_space<vmem>>, vector<1x64x256xf32>,
    %cst_10 = arith.constant dense<0.000000e+00> : vector<64xf32>
    %11 = vector.multi_reduction <add>, %7, %cst_10 [1] : vector<64x256xf32> to vector<64xf32>
    %12 = vector.shape_cast %11 : vector<64xf32> to vector<64x1xf32>
    %13 = arith.addf %2, %12 : vector<64x1xf32>
    %c1 = arith.constant 1 : index
    %c0_11 = arith.constant 0 : index
    %c0_12 = arith.constant 0 : index
    %14 = vector.load %arg1[%c1, %c0_11, %c0_12] : memref<2x8x256xf32, #tpu.memory_space<vmem>>, vector<1x8x256xf32>
    %15 = vector.shape_cast %14 : vector<1x8x256xf32> to vector<8x256xf32>
    %cst_13 = arith.constant dense<0.000000e+00> : vector<64x256xf32>
    %16 = tpu.matmul %0, %15, %cst_13 {dimension_numbers = #tpu.dot_dimension_numbers<[1], [0], [0], [1], [0, 0, 1, 1], [], []>} : vector<64x8xf32>, vector<8x256xf32>, vector<64x256xf32> -> vector<64x256xf32>
    %17 = vector.broadcast %1 : vector<64x1xf32> to vector<64x256xf32>
    %18 = arith.addf %16, %17 : vector<64x256xf32>
    %c1_14 = arith.constant 1 : index
    %c0_15 = arith.constant 0 : index
    %c0_16 = arith.constant 0 : index
    %19 = vector.load %arg6[%c1_14, %c0_15, %c0_16] : memref<2x64x256xf32, #tpu.memory_space<vmem>>, vector<1x64x256xf32>
    %20 = vector.shape_cast %19 : vector<1x64x256xf32> to vector<64x256xf32>
    %21 = vector.shape_cast %18 : vector<64x256xf32> to vector<1x64x256xf32>
    tpu.vector_store %arg6[%c1_14, %c0_15, %c0_16], %21 {strides = array<i32>} : memref<2x64x256xf32, #tpu.memory_space<vmem>>, vector<1x64x256xf32>,
    %cst_17 = arith.constant dense<0.000000e+00> : vector<64xf32>
    %22 = vector.multi_reduction <add>, %18, %cst_17 [1] : vector<64x256xf32> to vector<64xf32>
    %23 = vector.shape_cast %22 : vector<64xf32> to vector<64x1xf32>
    %24 = arith.addf %13, %23 : vector<64x1xf32>
    %cst_18 = arith.constant 0.001953125 : f32
    %25 = vector.broadcast %cst_18 : f32 to vector<64x1xf32>
    %26 = arith.mulf %24, %25 : vector<64x1xf32>
    %cst_19 = arith.constant 0.000000e+00 : f32
    %27 = vector.broadcast %cst_19 : f32 to vector<64x1xf32>
    %c0_20 = arith.constant 0 : index
    %c0_21 = arith.constant 0 : index
    %c0_22 = arith.constant 0 : index
    %28 = vector.load %arg6[%c0_20, %c0_21, %c0_22] : memref<2x64x256xf32, #tpu.memory_space<vmem>>, vector<1x64x256xf32>
    %29 = vector.shape_cast %28 : vector<1x64x256xf32> to vector<64x256xf32>
    %30 = vector.broadcast %26 : vector<64x1xf32> to vector<64x256xf32>
    %31 = arith.subf %29, %30 : vector<64x256xf32>
    %32 = arith.mulf %31, %31 : vector<64x256xf32>
    %cst_23 = arith.constant dense<0.000000e+00> : vector<64xf32>
    %33 = vector.multi_reduction <add>, %32, %cst_23 [1] : vector<64x256xf32> to vector<64xf32>
    %34 = vector.shape_cast %33 : vector<64xf32> to vector<64x1xf32>
    %35 = arith.addf %27, %34 : vector<64x1xf32>
    %c1_24 = arith.constant 1 : index
    %c0_25 = arith.constant 0 : index
    %c0_26 = arith.constant 0 : index
    %36 = vector.load %arg6[%c1_24, %c0_25, %c0_26] : memref<2x64x256xf32, #tpu.memory_space<vmem>>, vector<1x64x256xf32>
    %37 = vector.shape_cast %36 : vector<1x64x256xf32> to vector<64x256xf32>
    %38 = vector.broadcast %26 : vector<64x1xf32> to vector<64x256xf32>
    %39 = arith.subf %37, %38 : vector<64x256xf32>
    %40 = arith.mulf %39, %39 : vector<64x256xf32>
    %cst_27 = arith.constant dense<0.000000e+00> : vector<64xf32>
    %41 = vector.multi_reduction <add>, %40, %cst_27 [1] : vector<64x256xf32> to vector<64xf32>
    %42 = vector.shape_cast %41 : vector<64xf32> to vector<64x1xf32>
    %43 = arith.addf %35, %42 : vector<64x1xf32>
    %cst_28 = arith.constant 0.001953125 : f32
    %44 = vector.broadcast %cst_28 : f32 to vector<64x1xf32>
    %45 = arith.mulf %43, %44 : vector<64x1xf32>
    %cst_29 = arith.constant 9.99999974E-6 : f32
    %46 = vector.broadcast %cst_29 : f32 to vector<64x1xf32>
    %47 = arith.addf %45, %46 : vector<64x1xf32>
    %48 = math.rsqrt %47 : vector<64x1xf32>
    %c0_30 = arith.constant 0 : index
    %c0_31 = arith.constant 0 : index
    %49 = vector.load %arg4[%c0_30, %c0_31] : memref<64x1xf32, #tpu.memory_space<vmem>>, vector<64x1xf32>
    %50 = arith.mulf %49, %48 : vector<64x1xf32>
    %c0_32 = arith.constant 0 : index
    %c0_33 = arith.constant 0 : index
    %51 = vector.load %arg5[%c0_32, %c0_33] : memref<64x1xf32, #tpu.memory_space<vmem>>, vector<64x1xf32>
    %52 = arith.mulf %26, %50 : vector<64x1xf32>
    %53 = arith.subf %51, %52 : vector<64x1xf32>
    %c0_34 = arith.constant 0 : index
    %c0_35 = arith.constant 0 : index
    %c0_36 = arith.constant 0 : index
    %54 = vector.load %arg6[%c0_34, %c0_35, %c0_36] : memref<2x64x256xf32, #tpu.memory_space<vmem>>, vector<1x64x256xf32>
    %55 = vector.shape_cast %54 : vector<1x64x256xf32> to vector<64x256xf32>
    %56 = vector.broadcast %50 : vector<64x1xf32> to vector<64x256xf32>
    %57 = arith.mulf %55, %56 : vector<64x256xf32>
    %58 = vector.broadcast %53 : vector<64x1xf32> to vector<64x256xf32>
    %59 = arith.addf %57, %58 : vector<64x256xf32>
    %cst_37 = arith.constant 5.000000e-01 : f32
    %60 = vector.broadcast %cst_37 : f32 to vector<64x256xf32>
    %61 = arith.mulf %59, %60 : vector<64x256xf32>
    %62 = arith.mulf %59, %59 : vector<64x256xf32>
    %63 = arith.mulf %62, %59 : vector<64x256xf32>
    %cst_38 = arith.constant 4.471500e-02 : f32
    %64 = vector.broadcast %cst_38 : f32 to vector<64x256xf32>
    %65 = arith.mulf %63, %64 : vector<64x256xf32>
    %66 = arith.addf %59, %65 : vector<64x256xf32>
    %cst_39 = arith.constant 0.797884583 : f32
    %67 = vector.broadcast %cst_39 : f32 to vector<64x256xf32>
    %68 = arith.mulf %66, %67 : vector<64x256xf32>
    %69 = math.tanh %68 : vector<64x256xf32>
    %cst_40 = arith.constant 1.000000e+00 : f32
    %70 = vector.broadcast %cst_40 : f32 to vector<64x256xf32>
    %71 = arith.addf %69, %70 : vector<64x256xf32>
    %72 = arith.mulf %61, %71 : vector<64x256xf32>
    %c0_41 = arith.constant 0 : index
    %c0_42 = arith.constant 0 : index
    %c0_43 = arith.constant 0 : index
    %73 = vector.load %arg6[%c0_41, %c0_42, %c0_43] : memref<2x64x256xf32, #tpu.memory_space<vmem>>, vector<1x64x256xf32>
    %74 = vector.shape_cast %73 : vector<1x64x256xf32> to vector<64x256xf32>
    %75 = vector.shape_cast %72 : vector<64x256xf32> to vector<1x64x256xf32>
    tpu.vector_store %arg6[%c0_41, %c0_42, %c0_43], %75 {strides = array<i32>} : memref<2x64x256xf32, #tpu.memory_space<vmem>>, vector<1x64x256xf32>,
    %c1_44 = arith.constant 1 : index
    %c0_45 = arith.constant 0 : index
    %c0_46 = arith.constant 0 : index
    %76 = vector.load %arg6[%c1_44, %c0_45, %c0_46] : memref<2x64x256xf32, #tpu.memory_space<vmem>>, vector<1x64x256xf32>
    %77 = vector.shape_cast %76 : vector<1x64x256xf32> to vector<64x256xf32>
    %78 = vector.broadcast %50 : vector<64x1xf32> to vector<64x256xf32>
    %79 = arith.mulf %77, %78 : vector<64x256xf32>
    %80 = vector.broadcast %53 : vector<64x1xf32> to vector<64x256xf32>
    %81 = arith.addf %79, %80 : vector<64x256xf32>
    %cst_47 = arith.constant 5.000000e-01 : f32
    %82 = vector.broadcast %cst_47 : f32 to vector<64x256xf32>
    %83 = arith.mulf %81, %82 : vector<64x256xf32>
    %84 = arith.mulf %81, %81 : vector<64x256xf32>
    %85 = arith.mulf %84, %81 : vector<64x256xf32>
    %cst_48 = arith.constant 4.471500e-02 : f32
    %86 = vector.broadcast %cst_48 : f32 to vector<64x256xf32>
    %87 = arith.mulf %85, %86 : vector<64x256xf32>
    %88 = arith.addf %81, %87 : vector<64x256xf32>
    %cst_49 = arith.constant 0.797884583 : f32
    %89 = vector.broadcast %cst_49 : f32 to vector<64x256xf32>
    %90 = arith.mulf %88, %89 : vector<64x256xf32>
    %91 = math.tanh %90 : vector<64x256xf32>
    %cst_50 = arith.constant 1.000000e+00 : f32
    %92 = vector.broadcast %cst_50 : f32 to vector<64x256xf32>
    %93 = arith.addf %91, %92 : vector<64x256xf32>
    %94 = arith.mulf %83, %93 : vector<64x256xf32>
    %c1_51 = arith.constant 1 : index
    %c0_52 = arith.constant 0 : index
    %c0_53 = arith.constant 0 : index
    %95 = vector.load %arg6[%c1_51, %c0_52, %c0_53] : memref<2x64x256xf32, #tpu.memory_space<vmem>>, vector<1x64x256xf32>
    %96 = vector.shape_cast %95 : vector<1x64x256xf32> to vector<64x256xf32>
    %97 = vector.shape_cast %94 : vector<64x256xf32> to vector<1x64x256xf32>
    tpu.vector_store %arg6[%c1_51, %c0_52, %c0_53], %97 {strides = array<i32>} : memref<2x64x256xf32, #tpu.memory_space<vmem>>, vector<1x64x256xf32>,
    return
  }
  func.func @transform_0(%arg0: i32) -> (i32, i32, i32) {
    %c0_i32 = arith.constant 0 : i32
    %c0_i32_0 = arith.constant 0 : i32
    %c0_i32_1 = arith.constant 0 : i32
    %c0_i32_2 = arith.constant 0 : i32
    return %c0_i32, %c0_i32_0, %c0_i32_1 : i32, i32, i32
  }
  func.func @transform_1(%arg0: i32) -> (i32, i32) {
    %c0_i32 = arith.constant 0 : i32
    %c0_i32_0 = arith.constant 0 : i32
    %c0_i32_1 = arith.constant 0 : i32
    return %c0_i32, %c0_i32_0 : i32, i32
  }
  func.func @transform_2(%arg0: i32) -> (i32, i32) {
    %c0_i32 = arith.constant 0 : i32
    %c0_i32_0 = arith.constant 0 : i32
    %c0_i32_1 = arith.constant 0 : i32
    return %c0_i32, %c0_i32_0 : i32, i32
  }
  func.func @transform_3(%arg0: i32) -> (i32, i32) {
    %c0_i32 = arith.constant 0 : i32
    %c0_i32_0 = arith.constant 0 : i32
    %c0_i32_1 = arith.constant 0 : i32
    return %c0_i32, %c0_i32_0 : i32, i32
  }
  func.func @transform_4(%arg0: i32) -> (i32, i32) {
    %c0_i32 = arith.constant 0 : i32
    %c0_i32_0 = arith.constant 0 : i32
    %c0_i32_1 = arith.constant 0 : i32
    return %c0_i32, %c0_i32_0 : i32, i32
  }
  func.func @transform_5(%arg0: i32) -> (i32, i32, i32) {
    %c0_i32 = arith.constant 0 : i32
    %c0_i32_0 = arith.constant 0 : i32
    %c0_i32_1 = arith.constant 0 : i32
    %c0_i32_2 = arith.constant 0 : i32
    return %c0_i32, %c0_i32_0, %c0_i32_1 : i32, i32, i32
  }
}

</mosaic_0001>

<llo_original>
// kernel: tpu_custom_call.1
$region0: #{tpu_custom_call.1}
  #allocation0 [shape = 'u32[]', space=smem, size = 0x4, offset = 0x4, fixed_abs, tag = 'smem constant byte address 0x4 - core index']
  #allocation1 [shape = 'u32[72,128]{1,0:T(1,128)}', space=vmem, size = 0x9000, scoped, tag = 'internal scratch']
  %s0 = inlined_call_operand.vmem [shape: f32[2,8,256], index: 0, kind: input, shape index: {}]
  %s1 = inlined_call_operand.vmem [shape: f32[64,8], index: 1, kind: input, shape index: {}]
  %s2 = inlined_call_operand.vmem [shape: f32[64,1], index: 2, kind: input, shape index: {}]
  %s3 = inlined_call_operand.vmem [shape: f32[64,1], index: 3, kind: input, shape index: {}]
  %s4 = inlined_call_operand.vmem [shape: f32[64,1], index: 4, kind: input, shape index: {}]
  %s5 = inlined_call_operand.hbm [shape: f32[2,64,256], index: 5, kind: output, shape index: {}]
  %s6 = sld [smem:[#allocation0]]
  $region30: #{tpu_custom_call.1} parent=0
    _
  %s8 = ssub.s32 1, %s6
  %s9 = scalar_select 0, %s8, %s6
  $region1: #{tpu_custom_call.1} parent=0
    #allocation2 [shape = 'u8[131072]{0}', space=vmem, size = 0x20000, scoped, tag = 'output window, operand 0, single buffered']
    #allocation3 [shape = 's32[1]{0}', space=sflag, size = 0x4, scoped, tag = 'scoped memory for tpu_custom_call.1']
    %10 = vsyncpa [#allocation3], 0
    // Predicated region
    $region2: #{tpu_custom_call.1} parent=1 // pred_check
      _
    $region3: #{tpu_custom_call.1} parent=1 // pred_check_branch
      %12 = sbr.rel (0) target = $region5
    $region4: #{tpu_custom_call.1} parent=1 // pred_region
      _
    $region5: #{tpu_custom_call.1} parent=1 // pred_fallthru
      _
    // Predicated region
    $region6: #{tpu_custom_call.1} parent=1 // pred_check
      _
    $region7: #{tpu_custom_call.1} parent=1 // pred_check_branch
      %14 = sbr.rel (0) target = $region9
    $region8: #{tpu_custom_call.1} parent=1 // pred_region
      _
    $region9: #{tpu_custom_call.1} parent=1 // pred_fallthru
      _
    // Predicated region
    $region10: #{tpu_custom_call.1} parent=1 // pred_check
      _
    $region11: #{tpu_custom_call.1} parent=1 // pred_check_branch
      %16 = sbr.rel (0) target = $region13
    $region12: #{tpu_custom_call.1} parent=1 // pred_region
      _
    $region13: #{tpu_custom_call.1} parent=1 // pred_fallthru
      _
    // Predicated region
    $region14: #{tpu_custom_call.1} parent=1 // pred_check
      _
    $region15: #{tpu_custom_call.1} parent=1 // pred_check_branch
      %18 = sbr.rel (0) target = $region17
    $region16: #{tpu_custom_call.1} parent=1 // pred_region
      _
    $region17: #{tpu_custom_call.1} parent=1 // pred_fallthru
      _
    // Predicated region
    $region18: #{tpu_custom_call.1} parent=1 // pred_check
      _
    $region19: #{tpu_custom_call.1} parent=1 // pred_check_branch
      %20 = sbr.rel (0) target = $region21
    $region20: #{tpu_custom_call.1} parent=1 // pred_region
      _
    $region21: #{tpu_custom_call.1} parent=1 // pred_fallthru
      _
    %v21 = vld [vmem:[%s1] sm:$0xff]
    %v22 = vld [vmem:[%s1 + $0x8] sm:$0xff]
    %v23 = vld [vmem:[%s1 + $0x10] sm:$0xff]
    %v24 = vld [vmem:[%s1 + $0x18] sm:$0xff]
    %v25 = vld [vmem:[%s1 + $0x20] sm:$0xff]
    %v26 = vld [vmem:[%s1 + $0x28] sm:$0xff]
    %v27 = vld [vmem:[%s1 + $0x30] sm:$0xff]
    %v28 = vld [vmem:[%s1 + $0x38] sm:$0xff]
    %v29 = vld [vmem:[%s2] sm:$0xff]
    %v30 = vld [vmem:[%s2 + $0x8] sm:$0xff]
    %v31 = vld [vmem:[%s2 + $0x10] sm:$0xff]
    %v32 = vld [vmem:[%s2 + $0x18] sm:$0xff]
    %v33 = vld [vmem:[%s2 + $0x20] sm:$0xff]
    %v34 = vld [vmem:[%s2 + $0x28] sm:$0xff]
    %v35 = vld [vmem:[%s2 + $0x30] sm:$0xff]
    %v36 = vld [vmem:[%s2 + $0x38] sm:$0xff]
    %v37 = vld [vmem:[%s0] sm:$0xff]
    %v38 = vld [vmem:[%s0 + $0x8] sm:$0xff]
    %40 = vset.pattern.permute.xlu0 0
    %41 = vperm.xlu0 %40, %v29
    %v42 = vpop.permute.xlu0 %41
    %45 = vset.pattern.permute.xlu0 0
    %46 = vperm.xlu0 %45, %v30
    %v47 = vpop.permute.xlu0 %46
    %50 = vset.pattern.permute.xlu0 0
    %51 = vperm.xlu0 %50, %v31
    %v52 = vpop.permute.xlu0 %51
    %55 = vset.pattern.permute.xlu0 0
    %56 = vperm.xlu0 %55, %v32
    %v57 = vpop.permute.xlu0 %56
    %60 = vset.pattern.permute.xlu0 0
    %61 = vperm.xlu0 %60, %v33
    %v62 = vpop.permute.xlu0 %61
    %65 = vset.pattern.permute.xlu0 0
    %66 = vperm.xlu0 %65, %v34
    %v67 = vpop.permute.xlu0 %66
    %70 = vset.pattern.permute.xlu0 0
    %71 = vperm.xlu0 %70, %v35
    %v72 = vpop.permute.xlu0 %71
    %75 = vset.pattern.permute.xlu0 0
    %76 = vperm.xlu0 %75, %v36
    %v77 = vpop.permute.xlu0 %76
    %vm79 = vcmask 64512
    %v81 = vsel %vm79, %v21, 0
    %v84 = vsel %vm79, %v22, 0
    %v87 = vsel %vm79, %v23, 0
    %v90 = vsel %vm79, %v24, 0
    %v93 = vsel %vm79, %v25, 0
    %v96 = vsel %vm79, %v26, 0
    %v99 = vsel %vm79, %v27, 0
    %v102 = vsel %vm79, %v28, 0
    %104 = vmatpush.msra.mxu0 0.0
    %105 = vmatpush.msra.mxu0 0.0
    %106 = vmatpush.msra.mxu0 0.0
    %107 = vmatpush.msra.mxu0 0.0
    %108 = vmatpush.msra.mxu0 0.0
    %109 = vmatpush.msra.mxu0 0.0
    %110 = vmatpush.msra.mxu0 0.0
    %111 = vmatpush.msra.mxu0 0.0
    %112 = vmatpush.msra.mxu0 0.0
    %113 = vmatpush.msra.mxu0 0.0
    %114 = vmatpush.msra.mxu0 0.0
    %115 = vmatpush.msra.mxu0 0.0
    %116 = vmatpush.msra.mxu0 0.0
    %117 = vmatpush.msra.mxu0 0.0
    %118 = vmatpush.msra.mxu0 0.0
    %119 = vmatpush.msra.mxu0 %v37
    %120 = vmatmul.f32.gmra.mxu0 %v81
    %v121 = vpop.f32.mrf.mxu0
    %v122 = vadd.f32 %v42, %v121
    %123 = vmatmul.f32.gmra.mxu0 %v84
    %v124 = vpop.f32.mrf.mxu0
    %v125 = vadd.f32 %v47, %v124
    %126 = vmatmul.f32.gmra.mxu0 %v87
    %v127 = vpop.f32.mrf.mxu0
    %v128 = vadd.f32 %v52, %v127
    %129 = vmatmul.f32.gmra.mxu0 %v90
    %v130 = vpop.f32.mrf.mxu0
    %v131 = vadd.f32 %v57, %v130
    %132 = vmatmul.f32.gmra.mxu0 %v93
    %v133 = vpop.f32.mrf.mxu0
    %v134 = vadd.f32 %v62, %v133
    %135 = vmatmul.f32.gmra.mxu0 %v96
    %v136 = vpop.f32.mrf.mxu0
    %v137 = vadd.f32 %v67, %v136
    %138 = vmatmul.f32.gmra.mxu0 %v99
    %v139 = vpop.f32.mrf.mxu0
    %v140 = vadd.f32 %v72, %v139
    %141 = vmatmul.f32.gmra.mxu0 %v102
    %v142 = vpop.f32.mrf.mxu0
    %v143 = vadd.f32 %v77, %v142
    %144 = vdwg.mxu0
    %145 = vmatpush.msra.mxu0 0.0
    %146 = vmatpush.msra.mxu0 0.0
    %147 = vmatpush.msra.mxu0 0.0
    %148 = vmatpush.msra.mxu0 0.0
    %149 = vmatpush.msra.mxu0 0.0
    %150 = vmatpush.msra.mxu0 0.0
    %151 = vmatpush.msra.mxu0 0.0
    %152 = vmatpush.msra.mxu0 0.0
    %153 = vmatpush.msra.mxu0 0.0
    %154 = vmatpush.msra.mxu0 0.0
    %155 = vmatpush.msra.mxu0 0.0
    %156 = vmatpush.msra.mxu0 0.0
    %157 = vmatpush.msra.mxu0 0.0
    %158 = vmatpush.msra.mxu0 0.0
    %159 = vmatpush.msra.mxu0 0.0
    %160 = vmatpush.msra.mxu0 %v38
    %161 = vmatmul.f32.gmra.mxu0 %v81
    %v162 = vpop.f32.mrf.mxu0
    %v163 = vadd.f32 %v42, %v162
    %164 = vmatmul.f32.gmra.mxu0 %v84
    %v165 = vpop.f32.mrf.mxu0
    %v166 = vadd.f32 %v47, %v165
    %167 = vmatmul.f32.gmra.mxu0 %v87
    %v168 = vpop.f32.mrf.mxu0
    %v169 = vadd.f32 %v52, %v168
    %170 = vmatmul.f32.gmra.mxu0 %v90
    %v171 = vpop.f32.mrf.mxu0
    %v172 = vadd.f32 %v57, %v171
    %173 = vmatmul.f32.gmra.mxu0 %v93
    %v174 = vpop.f32.mrf.mxu0
    %v175 = vadd.f32 %v62, %v174
    %176 = vmatmul.f32.gmra.mxu0 %v96
    %v177 = vpop.f32.mrf.mxu0
    %v178 = vadd.f32 %v67, %v177
    %179 = vmatmul.f32.gmra.mxu0 %v99
    %v180 = vpop.f32.mrf.mxu0
    %v181 = vadd.f32 %v72, %v180
    %182 = vmatmul.f32.gmra.mxu0 %v102
    %v183 = vpop.f32.mrf.mxu0
    %v184 = vadd.f32 %v77, %v183
    %185 = vdwg.mxu0
    %186 = vst [vmem:[#allocation2] sm:$0xff] %v122
    %187 = vst [vmem:[#allocation2 + $0x8] sm:$0xff] %v163
    %188 = vst [vmem:[#allocation2 + $0x10] sm:$0xff] %v125
    %189 = vst [vmem:[#allocation2 + $0x18] sm:$0xff] %v166
    %190 = vst [vmem:[#allocation2 + $0x20] sm:$0xff] %v128
    %191 = vst [vmem:[#allocation2 + $0x28] sm:$0xff] %v169
    %192 = vst [vmem:[#allocation2 + $0x30] sm:$0xff] %v131
    %193 = vst [vmem:[#allocation2 + $0x38] sm:$0xff] %v172
    %194 = vst [vmem:[#allocation2 + $0x40] sm:$0xff] %v134
    %195 = vst [vmem:[#allocation2 + $0x48] sm:$0xff] %v175
    %196 = vst [vmem:[#allocation2 + $0x50] sm:$0xff] %v137
    %197 = vst [vmem:[#allocation2 + $0x58] sm:$0xff] %v178
    %198 = vst [vmem:[#allocation2 + $0x60] sm:$0xff] %v140
    %199 = vst [vmem:[#allocation2 + $0x68] sm:$0xff] %v181
    %200 = vst [vmem:[#allocation2 + $0x70] sm:$0xff] %v143
    %201 = vst [vmem:[#allocation2 + $0x78] sm:$0xff] %v184
    %v202 = vadd.f32 %v122, %v163
    %203 = vadd.xlane.f32.xlu0 %v202
    %v204 = vpop.xlane.xlu0 %203
    %v205 = vadd.f32 %v125, %v166
    %206 = vadd.xlane.f32.xlu0 %v205
    %v207 = vpop.xlane.xlu0 %206
    %v208 = vadd.f32 %v128, %v169
    %209 = vadd.xlane.f32.xlu0 %v208
    %v210 = vpop.xlane.xlu0 %209
    %v211 = vadd.f32 %v131, %v172
    %212 = vadd.xlane.f32.xlu0 %v211
    %v213 = vpop.xlane.xlu0 %212
    %v214 = vadd.f32 %v134, %v175
    %215 = vadd.xlane.f32.xlu0 %v214
    %v216 = vpop.xlane.xlu0 %215
    %v217 = vadd.f32 %v137, %v178
    %218 = vadd.xlane.f32.xlu0 %v217
    %v219 = vpop.xlane.xlu0 %218
    %v220 = vadd.f32 %v140, %v181
    %221 = vadd.xlane.f32.xlu0 %v220
    %v222 = vpop.xlane.xlu0 %221
    %v223 = vadd.f32 %v143, %v184
    %224 = vadd.xlane.f32.xlu0 %v223
    %v225 = vpop.xlane.xlu0 %224
    %v226 = vadd.f32 %v204, 0.0
    %v227 = vadd.f32 %v207, 0.0
    %v228 = vadd.f32 %v210, 0.0
    %v229 = vadd.f32 %v213, 0.0
    %v230 = vadd.f32 %v216, 0.0
    %v231 = vadd.f32 %v219, 0.0
    %v232 = vadd.f32 %v222, 0.0
    %v233 = vadd.f32 %v225, 0.0
    %s234 = scalar_lea.vmem %s0, 16
    %v235 = vld [vmem:[%s234] sm:$0xff]
    %v236 = vld [vmem:[%s234 + $0x8] sm:$0xff]
    %237 = vmatpush.msra.mxu0 0.0
    %238 = vmatpush.msra.mxu0 0.0
    %239 = vmatpush.msra.mxu0 0.0
    %240 = vmatpush.msra.mxu0 0.0
    %241 = vmatpush.msra.mxu0 0.0
    %242 = vmatpush.msra.mxu0 0.0
    %243 = vmatpush.msra.mxu0 0.0
    %244 = vmatpush.msra.mxu0 0.0
    %245 = vmatpush.msra.mxu0 0.0
    %246 = vmatpush.msra.mxu0 0.0
    %247 = vmatpush.msra.mxu0 0.0
    %248 = vmatpush.msra.mxu0 0.0
    %249 = vmatpush.msra.mxu0 0.0
    %250 = vmatpush.msra.mxu0 0.0
    %251 = vmatpush.msra.mxu0 0.0
    %252 = vmatpush.msra.mxu0 %v235
    %253 = vmatmul.f32.gmra.mxu0 %v81
    %v254 = vpop.f32.mrf.mxu0
    %v255 = vadd.f32 %v42, %v254
    %256 = vmatmul.f32.gmra.mxu0 %v84
    %v257 = vpop.f32.mrf.mxu0
    %v258 = vadd.f32 %v47, %v257
    %259 = vmatmul.f32.gmra.mxu0 %v87
    %v260 = vpop.f32.mrf.mxu0
    %v261 = vadd.f32 %v52, %v260
    %262 = vmatmul.f32.gmra.mxu0 %v90
    %v263 = vpop.f32.mrf.mxu0
    %v264 = vadd.f32 %v57, %v263
    %265 = vmatmul.f32.gmra.mxu0 %v93
    %v266 = vpop.f32.mrf.mxu0
    %v267 = vadd.f32 %v62, %v266
    %268 = vmatmul.f32.gmra.mxu0 %v96
    %v269 = vpop.f32.mrf.mxu0
    %v270 = vadd.f32 %v67, %v269
    %271 = vmatmul.f32.gmra.mxu0 %v99
    %v272 = vpop.f32.mrf.mxu0
    %v273 = vadd.f32 %v72, %v272
    %274 = vmatmul.f32.gmra.mxu0 %v102
    %v275 = vpop.f32.mrf.mxu0
    %v276 = vadd.f32 %v77, %v275
    %277 = vdwg.mxu0
    %278 = vmatpush.msra.mxu0 0.0
    %279 = vmatpush.msra.mxu0 0.0
    %280 = vmatpush.msra.mxu0 0.0
    %281 = vmatpush.msra.mxu0 0.0
    %282 = vmatpush.msra.mxu0 0.0
    %283 = vmatpush.msra.mxu0 0.0
    %284 = vmatpush.msra.mxu0 0.0
    %285 = vmatpush.msra.mxu0 0.0
    %286 = vmatpush.msra.mxu0 0.0
    %287 = vmatpush.msra.mxu0 0.0
    %288 = vmatpush.msra.mxu0 0.0
    %289 = vmatpush.msra.mxu0 0.0
    %290 = vmatpush.msra.mxu0 0.0
    %291 = vmatpush.msra.mxu0 0.0
    %292 = vmatpush.msra.mxu0 0.0
    %293 = vmatpush.msra.mxu0 %v236
    %294 = vmatmul.f32.gmra.mxu0 %v81
    %v295 = vpop.f32.mrf.mxu0
    %v296 = vadd.f32 %v42, %v295
    %297 = vmatmul.f32.gmra.mxu0 %v84
    %v298 = vpop.f32.mrf.mxu0
    %v299 = vadd.f32 %v47, %v298
    %300 = vmatmul.f32.gmra.mxu0 %v87
    %v301 = vpop.f32.mrf.mxu0
    %v302 = vadd.f32 %v52, %v301
    %303 = vmatmul.f32.gmra.mxu0 %v90
    %v304 = vpop.f32.mrf.mxu0
    %v305 = vadd.f32 %v57, %v304
    %306 = vmatmul.f32.gmra.mxu0 %v93
    %v307 = vpop.f32.mrf.mxu0
    %v308 = vadd.f32 %v62, %v307
    %309 = vmatmul.f32.gmra.mxu0 %v96
    %v310 = vpop.f32.mrf.mxu0
    %v311 = vadd.f32 %v67, %v310
    %312 = vmatmul.f32.gmra.mxu0 %v99
    %v313 = vpop.f32.mrf.mxu0
    %v314 = vadd.f32 %v72, %v313
    %315 = vmatmul.f32.gmra.mxu0 %v102
    %v316 = vpop.f32.mrf.mxu0
    %v317 = vadd.f32 %v77, %v316
    %318 = vdwg.mxu0
    %s319 = scalar_lea.vmem [#allocation2], 128
    %320 = vst [vmem:[%s319] sm:$0xff] %v255
    %321 = vst [vmem:[%s319 + $0x8] sm:$0xff] %v296
    %322 = vst [vmem:[%s319 + $0x10] sm:$0xff] %v258
    %323 = vst [vmem:[%s319 + $0x18] sm:$0xff] %v299
    %324 = vst [vmem:[%s319 + $0x20] sm:$0xff] %v261
    %325 = vst [vmem:[%s319 + $0x28] sm:$0xff] %v302
    %326 = vst [vmem:[%s319 + $0x30] sm:$0xff] %v264
    %327 = vst [vmem:[%s319 + $0x38] sm:$0xff] %v305
    %328 = vst [vmem:[%s319 + $0x40] sm:$0xff] %v267
    %329 = vst [vmem:[%s319 + $0x48] sm:$0xff] %v308
    %330 = vst [vmem:[%s319 + $0x50] sm:$0xff] %v270
    %331 = vst [vmem:[%s319 + $0x58] sm:$0xff] %v311
    %332 = vst [vmem:[%s319 + $0x60] sm:$0xff] %v273
    %333 = vst [vmem:[%s319 + $0x68] sm:$0xff] %v314
    %334 = vst [vmem:[%s319 + $0x70] sm:$0xff] %v276
    %335 = vst [vmem:[%s319 + $0x78] sm:$0xff] %v317
    %v336 = vadd.f32 %v255, %v296
    %337 = vadd.xlane.f32.xlu0 %v336
    %v338 = vpop.xlane.xlu0 %337
    %v339 = vadd.f32 %v258, %v299
    %340 = vadd.xlane.f32.xlu0 %v339
    %v341 = vpop.xlane.xlu0 %340
    %v342 = vadd.f32 %v261, %v302
    %343 = vadd.xlane.f32.xlu0 %v342
    %v344 = vpop.xlane.xlu0 %343
    %v345 = vadd.f32 %v264, %v305
    %346 = vadd.xlane.f32.xlu0 %v345
    %v347 = vpop.xlane.xlu0 %346
    %v348 = vadd.f32 %v267, %v308
    %349 = vadd.xlane.f32.xlu0 %v348
    %v350 = vpop.xlane.xlu0 %349
    %v351 = vadd.f32 %v270, %v311
    %352 = vadd.xlane.f32.xlu0 %v351
    %v353 = vpop.xlane.xlu0 %352
    %v354 = vadd.f32 %v273, %v314
    %355 = vadd.xlane.f32.xlu0 %v354
    %v356 = vpop.xlane.xlu0 %355
    %v357 = vadd.f32 %v276, %v317
    %358 = vadd.xlane.f32.xlu0 %v357
    %v359 = vpop.xlane.xlu0 %358
    %v360 = vadd.f32 %v226, %v338
    %v361 = vadd.f32 %v227, %v341
    %v362 = vadd.f32 %v228, %v344
    %v363 = vadd.f32 %v229, %v347
    %v364 = vadd.f32 %v230, %v350
    %v365 = vadd.f32 %v231, %v353
    %v366 = vadd.f32 %v232, %v356
    %v367 = vadd.f32 %v233, %v359
    %v368 = vmul.f32 %v360, 0.001953125
    %v369 = vmul.f32 %v361, 0.001953125
    %v370 = vmul.f32 %v362, 0.001953125
    %v371 = vmul.f32 %v363, 0.001953125
    %v372 = vmul.f32 %v364, 0.001953125
    %v373 = vmul.f32 %v365, 0.001953125
    %v374 = vmul.f32 %v366, 0.001953125
    %v375 = vmul.f32 %v367, 0.001953125
    %v376 = vld [vmem:[#allocation2] sm:$0xff]
    %v377 = vld [vmem:[#allocation2 + $0x8] sm:$0xff]
    %v378 = vld [vmem:[#allocation2 + $0x10] sm:$0xff]
    %v379 = vld [vmem:[#allocation2 + $0x18] sm:$0xff]
    %v380 = vld [vmem:[#allocation2 + $0x20] sm:$0xff]
    %v381 = vld [vmem:[#allocation2 + $0x28] sm:$0xff]
    %v382 = vld [vmem:[#allocation2 + $0x30] sm:$0xff]
    %v383 = vld [vmem:[#allocation2 + $0x38] sm:$0xff]
    %v384 = vld [vmem:[#allocation2 + $0x40] sm:$0xff]
    %v385 = vld [vmem:[#allocation2 + $0x48] sm:$0xff]
    %v386 = vld [vmem:[#allocation2 + $0x50] sm:$0xff]
    %v387 = vld [vmem:[#allocation2 + $0x58] sm:$0xff]
    %v388 = vld [vmem:[#allocation2 + $0x60] sm:$0xff]
    %v389 = vld [vmem:[#allocation2 + $0x68] sm:$0xff]
    %v390 = vld [vmem:[#allocation2 + $0x70] sm:$0xff]
    %v391 = vld [vmem:[#allocation2 + $0x78] sm:$0xff]
    %v392 = vsub.f32 %v376, %v368
    %v393 = vsub.f32 %v377, %v368
    %v394 = vsub.f32 %v378, %v369
    %v395 = vsub.f32 %v379, %v369
    %v396 = vsub.f32 %v380, %v370
    %v397 = vsub.f32 %v381, %v370
    %v398 = vsub.f32 %v382, %v371
    %v399 = vsub.f32 %v383, %v371
    %v400 = vsub.f32 %v384, %v372
    %v401 = vsub.f32 %v385, %v372
    %v402 = vsub.f32 %v386, %v373
    %v403 = vsub.f32 %v387, %v373
    %v404 = vsub.f32 %v388, %v374
    %v405 = vsub.f32 %v389, %v374
    %v406 = vsub.f32 %v390, %v375
    %v407 = vsub.f32 %v391, %v375
    %v408 = vmul.f32 %v392, %v392
    %v409 = vmul.f32 %v393, %v393
    %v410 = vmul.f32 %v394, %v394
    %v411 = vmul.f32 %v395, %v395
    %v412 = vmul.f32 %v396, %v396
    %v413 = vmul.f32 %v397, %v397
    %v414 = vmul.f32 %v398, %v398
    %v415 = vmul.f32 %v399, %v399
    %v416 = vmul.f32 %v400, %v400
    %v417 = vmul.f32 %v401, %v401
    %v418 = vmul.f32 %v402, %v402
    %v419 = vmul.f32 %v403, %v403
    %v420 = vmul.f32 %v404, %v404
    %v421 = vmul.f32 %v405, %v405
    %v422 = vmul.f32 %v406, %v406
    %v423 = vmul.f32 %v407, %v407
    %v424 = vadd.f32 %v408, %v409
    %425 = vadd.xlane.f32.xlu0 %v424
    %v426 = vpop.xlane.xlu0 %425
    %v427 = vadd.f32 %v410, %v411
    %428 = vadd.xlane.f32.xlu0 %v427
    %v429 = vpop.xlane.xlu0 %428
    %v430 = vadd.f32 %v412, %v413
    %431 = vadd.xlane.f32.xlu0 %v430
    %v432 = vpop.xlane.xlu0 %431
    %v433 = vadd.f32 %v414, %v415
    %434 = vadd.xlane.f32.xlu0 %v433
    %v435 = vpop.xlane.xlu0 %434
    %v436 = vadd.f32 %v416, %v417
    %437 = vadd.xlane.f32.xlu0 %v436
    %v438 = vpop.xlane.xlu0 %437
    %v439 = vadd.f32 %v418, %v419
    %440 = vadd.xlane.f32.xlu0 %v439
    %v441 = vpop.xlane.xlu0 %440
    %v442 = vadd.f32 %v420, %v421
    %443 = vadd.xlane.f32.xlu0 %v442
    %v444 = vpop.xlane.xlu0 %443
    %v445 = vadd.f32 %v422, %v423
    %446 = vadd.xlane.f32.xlu0 %v445
    %v447 = vpop.xlane.xlu0 %446
    %v448 = vadd.f32 %v426, 0.0
    %v449 = vadd.f32 %v429, 0.0
    %v450 = vadd.f32 %v432, 0.0
    %v451 = vadd.f32 %v435, 0.0
    %v452 = vadd.f32 %v438, 0.0
    %v453 = vadd.f32 %v441, 0.0
    %v454 = vadd.f32 %v444, 0.0
    %v455 = vadd.f32 %v447, 0.0
    %v456 = vld [vmem:[%s319] sm:$0xff]
    %v457 = vld [vmem:[%s319 + $0x8] sm:$0xff]
    %v458 = vld [vmem:[%s319 + $0x10] sm:$0xff]
    %v459 = vld [vmem:[%s319 + $0x18] sm:$0xff]
    %v460 = vld [vmem:[%s319 + $0x20] sm:$0xff]
    %v461 = vld [vmem:[%s319 + $0x28] sm:$0xff]
    %v462 = vld [vmem:[%s319 + $0x30] sm:$0xff]
    %v463 = vld [vmem:[%s319 + $0x38] sm:$0xff]
    %v464 = vld [vmem:[%s319 + $0x40] sm:$0xff]
    %v465 = vld [vmem:[%s319 + $0x48] sm:$0xff]
    %v466 = vld [vmem:[%s319 + $0x50] sm:$0xff]
    %v467 = vld [vmem:[%s319 + $0x58] sm:$0xff]
    %v468 = vld [vmem:[%s319 + $0x60] sm:$0xff]
    %v469 = vld [vmem:[%s319 + $0x68] sm:$0xff]
    %v470 = vld [vmem:[%s319 + $0x70] sm:$0xff]
    %v471 = vld [vmem:[%s319 + $0x78] sm:$0xff]
    %v472 = vsub.f32 %v456, %v368
    %v473 = vsub.f32 %v457, %v368
    %v474 = vsub.f32 %v458, %v369
    %v475 = vsub.f32 %v459, %v369
    %v476 = vsub.f32 %v460, %v370
    %v477 = vsub.f32 %v461, %v370
    %v478 = vsub.f32 %v462, %v371
    %v479 = vsub.f32 %v463, %v371
    %v480 = vsub.f32 %v464, %v372
    %v481 = vsub.f32 %v465, %v372
    %v482 = vsub.f32 %v466, %v373
    %v483 = vsub.f32 %v467, %v373
    %v484 = vsub.f32 %v468, %v374
    %v485 = vsub.f32 %v469, %v374
    %v486 = vsub.f32 %v470, %v375
    %v487 = vsub.f32 %v471, %v375
    %v488 = vmul.f32 %v472, %v472
    %v489 = vmul.f32 %v473, %v473
    %v490 = vmul.f32 %v474, %v474
    %v491 = vmul.f32 %v475, %v475
    %v492 = vmul.f32 %v476, %v476
    %v493 = vmul.f32 %v477, %v477
    %v494 = vmul.f32 %v478, %v478
    %v495 = vmul.f32 %v479, %v479
    %v496 = vmul.f32 %v480, %v480
    %v497 = vmul.f32 %v481, %v481
    %v498 = vmul.f32 %v482, %v482
    %v499 = vmul.f32 %v483, %v483
    %v500 = vmul.f32 %v484, %v484
    %v501 = vmul.f32 %v485, %v485
    %v502 = vmul.f32 %v486, %v486
    %v503 = vmul.f32 %v487, %v487
    %v504 = vadd.f32 %v488, %v489
    %505 = vadd.xlane.f32.xlu0 %v504
    %v506 = vpop.xlane.xlu0 %505
    %v507 = vadd.f32 %v490, %v491
    %508 = vadd.xlane.f32.xlu0 %v507
    %v509 = vpop.xlane.xlu0 %508
    %v510 = vadd.f32 %v492, %v493
    %511 = vadd.xlane.f32.xlu0 %v510
    %v512 = vpop.xlane.xlu0 %511
    %v513 = vadd.f32 %v494, %v495
    %514 = vadd.xlane.f32.xlu0 %v513
    %v515 = vpop.xlane.xlu0 %514
    %v516 = vadd.f32 %v496, %v497
    %517 = vadd.xlane.f32.xlu0 %v516
    %v518 = vpop.xlane.xlu0 %517
    %v519 = vadd.f32 %v498, %v499
    %520 = vadd.xlane.f32.xlu0 %v519
    %v521 = vpop.xlane.xlu0 %520
    %v522 = vadd.f32 %v500, %v501
    %523 = vadd.xlane.f32.xlu0 %v522
    %v524 = vpop.xlane.xlu0 %523
    %v525 = vadd.f32 %v502, %v503
    %526 = vadd.xlane.f32.xlu0 %v525
    %v527 = vpop.xlane.xlu0 %526
    %v528 = vadd.f32 %v448, %v506
    %v529 = vadd.f32 %v449, %v509
    %v530 = vadd.f32 %v450, %v512
    %v531 = vadd.f32 %v451, %v515
    %v532 = vadd.f32 %v452, %v518
    %v533 = vadd.f32 %v453, %v521
    %v534 = vadd.f32 %v454, %v524
    %v535 = vadd.f32 %v455, %v527
    %v536 = vmul.f32 %v528, 0.001953125
    %v537 = vmul.f32 %v529, 0.001953125
    %v538 = vmul.f32 %v530, 0.001953125
    %v539 = vmul.f32 %v531, 0.001953125
    %v540 = vmul.f32 %v532, 0.001953125
    %v541 = vmul.f32 %v533, 0.001953125
    %v542 = vmul.f32 %v534, 0.001953125
    %v543 = vmul.f32 %v535, 0.001953125
    %v544 = vadd.f32 %v536, 1e-05
    %v545 = vadd.f32 %v537, 1e-05
    %v546 = vadd.f32 %v538, 1e-05
    %v547 = vadd.f32 %v539, 1e-05
    %v548 = vadd.f32 %v540, 1e-05
    %v549 = vadd.f32 %v541, 1e-05
    %v550 = vadd.f32 %v542, 1e-05
    %v551 = vadd.f32 %v543, 1e-05
    %v552 = vrsqrt.pop %v544
    %v553 = vmul.f32 %v552, %v544
    %v554 = vmul.f32 %v553, %v552
    %v555 = vmul.f32 0.5, %v554
    %v556 = vsub.f32 1.5, %v555
    %v557 = vmul.f32 %v552, %v556
    %vm558 = vweird.f32 %v544
    %vm559 = vweird.f32 %v552
    %vm560 = vmor %vm558, %vm559
    %v561 = vsel %vm560, %v552, %v557
    %v562 = vrsqrt.pop %v545
    %v563 = vmul.f32 %v562, %v545
    %v564 = vmul.f32 %v563, %v562
    %v565 = vmul.f32 0.5, %v564
    %v566 = vsub.f32 1.5, %v565
    %v567 = vmul.f32 %v562, %v566
    %vm568 = vweird.f32 %v545
    %vm569 = vweird.f32 %v562
    %vm570 = vmor %vm568, %vm569
    %v571 = vsel %vm570, %v562, %v567
    %v572 = vrsqrt.pop %v546
    %v573 = vmul.f32 %v572, %v546
    %v574 = vmul.f32 %v573, %v572
    %v575 = vmul.f32 0.5, %v574
    %v576 = vsub.f32 1.5, %v575
    %v577 = vmul.f32 %v572, %v576
    %vm578 = vweird.f32 %v546
    %vm579 = vweird.f32 %v572
    %vm580 = vmor %vm578, %vm579
    %v581 = vsel %vm580, %v572, %v577
    %v582 = vrsqrt.pop %v547
    %v583 = vmul.f32 %v582, %v547
    %v584 = vmul.f32 %v583, %v582
    %v585 = vmul.f32 0.5, %v584
    %v586 = vsub.f32 1.5, %v585
    %v587 = vmul.f32 %v582, %v586
    %vm588 = vweird.f32 %v547
    %vm589 = vweird.f32 %v582
    %vm590 = vmor %vm588, %vm589
    %v591 = vsel %vm590, %v582, %v587
    %v592 = vrsqrt.pop %v548
    %v593 = vmul.f32 %v592, %v548
    %v594 = vmul.f32 %v593, %v592
    %v595 = vmul.f32 0.5, %v594
    %v596 = vsub.f32 1.5, %v595
    %v597 = vmul.f32 %v592, %v596
    %vm598 = vweird.f32 %v548
    %vm599 = vweird.f32 %v592
    %vm600 = vmor %vm598, %vm599
    %v601 = vsel %vm600, %v592, %v597
    %v602 = vrsqrt.pop %v549
    %v603 = vmul.f32 %v602, %v549
    %v604 = vmul.f32 %v603, %v602
    %v605 = vmul.f32 0.5, %v604
    %v606 = vsub.f32 1.5, %v605
    %v607 = vmul.f32 %v602, %v606
    %vm608 = vweird.f32 %v549
    %vm609 = vweird.f32 %v602
    %vm610 = vmor %vm608, %vm609
    %v611 = vsel %vm610, %v602, %v607
    %v612 = vrsqrt.pop %v550
    %v613 = vmul.f32 %v612, %v550
    %v614 = vmul.f32 %v613, %v612
    %v615 = vmul.f32 0.5, %v614
    %v616 = vsub.f32 1.5, %v615
    %v617 = vmul.f32 %v612, %v616
    %vm618 = vweird.f32 %v550
    %vm619 = vweird.f32 %v612
    %vm620 = vmor %vm618, %vm619
    %v621 = vsel %vm620, %v612, %v617
    %v622 = vrsqrt.pop %v551
    %v623 = vmul.f32 %v622, %v551
    %v624 = vmul.f32 %v623, %v622
    %v625 = vmul.f32 0.5, %v624
    %v626 = vsub.f32 1.5, %v625
    %v627 = vmul.f32 %v622, %v626
    %vm628 = vweird.f32 %v551
    %vm629 = vweird.f32 %v622
    %vm630 = vmor %vm628, %vm629
    %v631 = vsel %vm630, %v622, %v627
    %v632 = vld [vmem:[%s3] sm:$0xff]
    %v633 = vld [vmem:[%s3 + $0x8] sm:$0xff]
    %v634 = vld [vmem:[%s3 + $0x10] sm:$0xff]
    %v635 = vld [vmem:[%s3 + $0x18] sm:$0xff]
    %v636 = vld [vmem:[%s3 + $0x20] sm:$0xff]
    %v637 = vld [vmem:[%s3 + $0x28] sm:$0xff]
    %v638 = vld [vmem:[%s3 + $0x30] sm:$0xff]
    %v639 = vld [vmem:[%s3 + $0x38] sm:$0xff]
    %v640 = vmul.f32 %v632, %v561
    %v641 = vmul.f32 %v633, %v571
    %v642 = vmul.f32 %v634, %v581
    %v643 = vmul.f32 %v635, %v591
    %v644 = vmul.f32 %v636, %v601
    %v645 = vmul.f32 %v637, %v611
    %v646 = vmul.f32 %v638, %v621
    %v647 = vmul.f32 %v639, %v631
    %v648 = vld [vmem:[%s4] sm:$0xff]
    %v649 = vld [vmem:[%s4 + $0x8] sm:$0xff]
    %v650 = vld [vmem:[%s4 + $0x10] sm:$0xff]
    %v651 = vld [vmem:[%s4 + $0x18] sm:$0xff]
    %v652 = vld [vmem:[%s4 + $0x20] sm:$0xff]
    %v653 = vld [vmem:[%s4 + $0x28] sm:$0xff]
    %v654 = vld [vmem:[%s4 + $0x30] sm:$0xff]
    %v655 = vld [vmem:[%s4 + $0x38] sm:$0xff]
    %v656 = vmul.f32 %v368, %v640
    %v657 = vmul.f32 %v369, %v641
    %v658 = vmul.f32 %v370, %v642
    %v659 = vmul.f32 %v371, %v643
    %v660 = vmul.f32 %v372, %v644
    %v661 = vmul.f32 %v373, %v645
    %v662 = vmul.f32 %v374, %v646
    %v663 = vmul.f32 %v375, %v647
    %v664 = vsub.f32 %v648, %v656
    %v665 = vsub.f32 %v649, %v657
    %v666 = vsub.f32 %v650, %v658
    %v667 = vsub.f32 %v651, %v659
    %v668 = vsub.f32 %v652, %v660
    %v669 = vsub.f32 %v653, %v661
    %v670 = vsub.f32 %v654, %v662
    %v671 = vsub.f32 %v655, %v663
    %673 = vset.pattern.permute.xlu0 0
    %674 = vperm.xlu0 %673, %v640
    %v675 = vpop.permute.xlu0 %674
    %678 = vset.pattern.permute.xlu0 0
    %679 = vperm.xlu0 %678, %v641
    %v680 = vpop.permute.xlu0 %679
    %683 = vset.pattern.permute.xlu0 0
    %684 = vperm.xlu0 %683, %v642
    %v685 = vpop.permute.xlu0 %684
    %688 = vset.pattern.permute.xlu0 0
    %689 = vperm.xlu0 %688, %v643
    %v690 = vpop.permute.xlu0 %689
    %693 = vset.pattern.permute.xlu0 0
    %694 = vperm.xlu0 %693, %v644
    %v695 = vpop.permute.xlu0 %694
    %698 = vset.pattern.permute.xlu0 0
    %699 = vperm.xlu0 %698, %v645
    %v700 = vpop.permute.xlu0 %699
    %703 = vset.pattern.permute.xlu0 0
    %704 = vperm.xlu0 %703, %v646
    %v705 = vpop.permute.xlu0 %704
    %708 = vset.pattern.permute.xlu0 0
    %709 = vperm.xlu0 %708, %v647
    %v710 = vpop.permute.xlu0 %709
    %v712 = vmul.f32 %v376, %v675
    %v713 = vmul.f32 %v377, %v675
    %v714 = vmul.f32 %v378, %v680
    %v715 = vmul.f32 %v379, %v680
    %v716 = vmul.f32 %v380, %v685
    %v717 = vmul.f32 %v381, %v685
    %v718 = vmul.f32 %v382, %v690
    %v719 = vmul.f32 %v383, %v690
    %v720 = vmul.f32 %v384, %v695
    %v721 = vmul.f32 %v385, %v695
    %v722 = vmul.f32 %v386, %v700
    %v723 = vmul.f32 %v387, %v700
    %v724 = vmul.f32 %v388, %v705
    %v725 = vmul.f32 %v389, %v705
    %v726 = vmul.f32 %v390, %v710
    %v727 = vmul.f32 %v391, %v710
    %729 = vset.pattern.permute.xlu0 0
    %730 = vperm.xlu0 %729, %v664
    %v731 = vpop.permute.xlu0 %730
    %734 = vset.pattern.permute.xlu0 0
    %735 = vperm.xlu0 %734, %v665
    %v736 = vpop.permute.xlu0 %735
    %739 = vset.pattern.permute.xlu0 0
    %740 = vperm.xlu0 %739, %v666
    %v741 = vpop.permute.xlu0 %740
    %744 = vset.pattern.permute.xlu0 0
    %745 = vperm.xlu0 %744, %v667
    %v746 = vpop.permute.xlu0 %745
    %749 = vset.pattern.permute.xlu0 0
    %750 = vperm.xlu0 %749, %v668
    %v751 = vpop.permute.xlu0 %750
    %754 = vset.pattern.permute.xlu0 0
    %755 = vperm.xlu0 %754, %v669
    %v756 = vpop.permute.xlu0 %755
    %759 = vset.pattern.permute.xlu0 0
    %760 = vperm.xlu0 %759, %v670
    %v761 = vpop.permute.xlu0 %760
    %764 = vset.pattern.permute.xlu0 0
    %765 = vperm.xlu0 %764, %v671
    %v766 = vpop.permute.xlu0 %765
    %v768 = vadd.f32 %v712, %v731
    %v769 = vadd.f32 %v713, %v731
    %v770 = vadd.f32 %v714, %v736
    %v771 = vadd.f32 %v715, %v736
    %v772 = vadd.f32 %v716, %v741
    %v773 = vadd.f32 %v717, %v741
    %v774 = vadd.f32 %v718, %v746
    %v775 = vadd.f32 %v719, %v746
    %v776 = vadd.f32 %v720, %v751
    %v777 = vadd.f32 %v721, %v751
    %v778 = vadd.f32 %v722, %v756
    %v779 = vadd.f32 %v723, %v756
    %v780 = vadd.f32 %v724, %v761
    %v781 = vadd.f32 %v725, %v761
    %v782 = vadd.f32 %v726, %v766
    %v783 = vadd.f32 %v727, %v766
    %v784 = vmul.f32 %v768, 0.5
    %v785 = vmul.f32 %v769, 0.5
    %v786 = vmul.f32 %v770, 0.5
    %v787 = vmul.f32 %v771, 0.5
    %v788 = vmul.f32 %v772, 0.5
    %v789 = vmul.f32 %v773, 0.5
    %v790 = vmul.f32 %v774, 0.5
    %v791 = vmul.f32 %v775, 0.5
    %v792 = vmul.f32 %v776, 0.5
    %v793 = vmul.f32 %v777, 0.5
    %v794 = vmul.f32 %v778, 0.5
    %v795 = vmul.f32 %v779, 0.5
    %v796 = vmul.f32 %v780, 0.5
    %v797 = vmul.f32 %v781, 0.5
    %v798 = vmul.f32 %v782, 0.5
    %v799 = vmul.f32 %v783, 0.5
    %v800 = vmul.f32 %v768, %v768
    %v801 = vmul.f32 %v769, %v769
    %v802 = vmul.f32 %v770, %v770
    %v803 = vmul.f32 %v771, %v771
    %v804 = vmul.f32 %v772, %v772
    %v805 = vmul.f32 %v773, %v773
    %v806 = vmul.f32 %v774, %v774
    %v807 = vmul.f32 %v775, %v775
    %v808 = vmul.f32 %v776, %v776
    %v809 = vmul.f32 %v777, %v777
    %v810 = vmul.f32 %v778, %v778
    %v811 = vmul.f32 %v779, %v779
    %v812 = vmul.f32 %v780, %v780
    %v813 = vmul.f32 %v781, %v781
    %v814 = vmul.f32 %v782, %v782
    %v815 = vmul.f32 %v783, %v783
    %v816 = vmul.f32 %v800, %v768
    %v817 = vmul.f32 %v801, %v769
    %v818 = vmul.f32 %v802, %v770
    %v819 = vmul.f32 %v803, %v771
    %v820 = vmul.f32 %v804, %v772
    %v821 = vmul.f32 %v805, %v773
    %v822 = vmul.f32 %v806, %v774
    %v823 = vmul.f32 %v807, %v775
    %v824 = vmul.f32 %v808, %v776
    %v825 = vmul.f32 %v809, %v777
    %v826 = vmul.f32 %v810, %v778
    %v827 = vmul.f32 %v811, %v779
    %v828 = vmul.f32 %v812, %v780
    %v829 = vmul.f32 %v813, %v781
    %v830 = vmul.f32 %v814, %v782
    %v831 = vmul.f32 %v815, %v783
    %v832 = vmul.f32 %v816, 0.044715
    %v833 = vmul.f32 %v817, 0.044715
    %v834 = vmul.f32 %v818, 0.044715
    %v835 = vmul.f32 %v819, 0.044715
    %v836 = vmul.f32 %v820, 0.044715
    %v837 = vmul.f32 %v821, 0.044715
    %v838 = vmul.f32 %v822, 0.044715
    %v839 = vmul.f32 %v823, 0.044715
    %v840 = vmul.f32 %v824, 0.044715
    %v841 = vmul.f32 %v825, 0.044715
    %v842 = vmul.f32 %v826, 0.044715
    %v843 = vmul.f32 %v827, 0.044715
    %v844 = vmul.f32 %v828, 0.044715
    %v845 = vmul.f32 %v829, 0.044715
    %v846 = vmul.f32 %v830, 0.044715
    %v847 = vmul.f32 %v831, 0.044715
    %v848 = vadd.f32 %v768, %v832
    %v849 = vadd.f32 %v769, %v833
    %v850 = vadd.f32 %v770, %v834
    %v851 = vadd.f32 %v771, %v835
    %v852 = vadd.f32 %v772, %v836
    %v853 = vadd.f32 %v773, %v837
    %v854 = vadd.f32 %v774, %v838
    %v855 = vadd.f32 %v775, %v839
    %v856 = vadd.f32 %v776, %v840
    %v857 = vadd.f32 %v777, %v841
    %v858 = vadd.f32 %v778, %v842
    %v859 = vadd.f32 %v779, %v843
    %v860 = vadd.f32 %v780, %v844
    %v861 = vadd.f32 %v781, %v845
    %v862 = vadd.f32 %v782, %v846
    %v863 = vadd.f32 %v783, %v847
    %v864 = vmul.f32 %v848, 0.7978846
    %v865 = vmul.f32 %v849, 0.7978846
    %v866 = vmul.f32 %v850, 0.7978846
    %v867 = vmul.f32 %v851, 0.7978846
    %v868 = vmul.f32 %v852, 0.7978846
    %v869 = vmul.f32 %v853, 0.7978846
    %v870 = vmul.f32 %v854, 0.7978846
    %v871 = vmul.f32 %v855, 0.7978846
    %v872 = vmul.f32 %v856, 0.7978846
    %v873 = vmul.f32 %v857, 0.7978846
    %v874 = vmul.f32 %v858, 0.7978846
    %v875 = vmul.f32 %v859, 0.7978846
    %v876 = vmul.f32 %v860, 0.7978846
    %v877 = vmul.f32 %v861, 0.7978846
    %v878 = vmul.f32 %v862, 0.7978846
    %v879 = vmul.f32 %v863, 0.7978846
    %v880 = vtanh.pop %v864
    %v881 = vtanh.pop %v865
    %v882 = vtanh.pop %v866
    %v883 = vtanh.pop %v867
    %v884 = vtanh.pop %v868
    %v885 = vtanh.pop %v869
    %v886 = vtanh.pop %v870
    %v887 = vtanh.pop %v871
    %v888 = vtanh.pop %v872
    %v889 = vtanh.pop %v873
    %v890 = vtanh.pop %v874
    %v891 = vtanh.pop %v875
    %v892 = vtanh.pop %v876
    %v893 = vtanh.pop %v877
    %v894 = vtanh.pop %v878
    %v895 = vtanh.pop %v879
    %v896 = vadd.f32 %v880, 1.0
    %v897 = vadd.f32 %v881, 1.0
    %v898 = vadd.f32 %v882, 1.0
    %v899 = vadd.f32 %v883, 1.0
    %v900 = vadd.f32 %v884, 1.0
    %v901 = vadd.f32 %v885, 1.0
    %v902 = vadd.f32 %v886, 1.0
    %v903 = vadd.f32 %v887, 1.0
    %v904 = vadd.f32 %v888, 1.0
    %v905 = vadd.f32 %v889, 1.0
    %v906 = vadd.f32 %v890, 1.0
    %v907 = vadd.f32 %v891, 1.0
    %v908 = vadd.f32 %v892, 1.0
    %v909 = vadd.f32 %v893, 1.0
    %v910 = vadd.f32 %v894, 1.0
    %v911 = vadd.f32 %v895, 1.0
    %v912 = vmul.f32 %v784, %v896
    %v913 = vmul.f32 %v785, %v897
    %v914 = vmul.f32 %v786, %v898
    %v915 = vmul.f32 %v787, %v899
    %v916 = vmul.f32 %v788, %v900
    %v917 = vmul.f32 %v789, %v901
    %v918 = vmul.f32 %v790, %v902
    %v919 = vmul.f32 %v791, %v903
    %v920 = vmul.f32 %v792, %v904
    %v921 = vmul.f32 %v793, %v905
    %v922 = vmul.f32 %v794, %v906
    %v923 = vmul.f32 %v795, %v907
    %v924 = vmul.f32 %v796, %v908
    %v925 = vmul.f32 %v797, %v909
    %v926 = vmul.f32 %v798, %v910
    %v927 = vmul.f32 %v799, %v911
    %928 = vst [vmem:[#allocation2] sm:$0xff] %v912
    %929 = vst [vmem:[#allocation2 + $0x8] sm:$0xff] %v913
    %930 = vst [vmem:[#allocation2 + $0x10] sm:$0xff] %v914
    %931 = vst [vmem:[#allocation2 + $0x18] sm:$0xff] %v915
    %932 = vst [vmem:[#allocation2 + $0x20] sm:$0xff] %v916
    %933 = vst [vmem:[#allocation2 + $0x28] sm:$0xff] %v917
    %934 = vst [vmem:[#allocation2 + $0x30] sm:$0xff] %v918
    %935 = vst [vmem:[#allocation2 + $0x38] sm:$0xff] %v919
    %936 = vst [vmem:[#allocation2 + $0x40] sm:$0xff] %v920
    %937 = vst [vmem:[#allocation2 + $0x48] sm:$0xff] %v921
    %938 = vst [vmem:[#allocation2 + $0x50] sm:$0xff] %v922
    %939 = vst [vmem:[#allocation2 + $0x58] sm:$0xff] %v923
    %940 = vst [vmem:[#allocation2 + $0x60] sm:$0xff] %v924
    %941 = vst [vmem:[#allocation2 + $0x68] sm:$0xff] %v925
    %942 = vst [vmem:[#allocation2 + $0x70] sm:$0xff] %v926
    %943 = vst [vmem:[#allocation2 + $0x78] sm:$0xff] %v927
    %v944 = vld [vmem:[%s319] sm:$0xff]
    %v945 = vld [vmem:[%s319 + $0x8] sm:$0xff]
    %v946 = vld [vmem:[%s319 + $0x10] sm:$0xff]
    %v947 = vld [vmem:[%s319 + $0x18] sm:$0xff]
    %v948 = vld [vmem:[%s319 + $0x20] sm:$0xff]
    %v949 = vld [vmem:[%s319 + $0x28] sm:$0xff]
    %v950 = vld [vmem:[%s319 + $0x30] sm:$0xff]
    %v951 = vld [vmem:[%s319 + $0x38] sm:$0xff]
    %v952 = vld [vmem:[%s319 + $0x40] sm:$0xff]
    %v953 = vld [vmem:[%s319 + $0x48] sm:$0xff]
    %v954 = vld [vmem:[%s319 + $0x50] sm:$0xff]
    %v955 = vld [vmem:[%s319 + $0x58] sm:$0xff]
    %v956 = vld [vmem:[%s319 + $0x60] sm:$0xff]
    %v957 = vld [vmem:[%s319 + $0x68] sm:$0xff]
    %v958 = vld [vmem:[%s319 + $0x70] sm:$0xff]
    %v959 = vld [vmem:[%s319 + $0x78] sm:$0xff]
    %v960 = vmul.f32 %v944, %v675
    %v961 = vmul.f32 %v945, %v675
    %v962 = vmul.f32 %v946, %v680
    %v963 = vmul.f32 %v947, %v680
    %v964 = vmul.f32 %v948, %v685
    %v965 = vmul.f32 %v949, %v685
    %v966 = vmul.f32 %v950, %v690
    %v967 = vmul.f32 %v951, %v690
    %v968 = vmul.f32 %v952, %v695
    %v969 = vmul.f32 %v953, %v695
    %v970 = vmul.f32 %v954, %v700
    %v971 = vmul.f32 %v955, %v700
    %v972 = vmul.f32 %v956, %v705
    %v973 = vmul.f32 %v957, %v705
    %v974 = vmul.f32 %v958, %v710
    %v975 = vmul.f32 %v959, %v710
    %v976 = vadd.f32 %v960, %v731
    %v977 = vadd.f32 %v961, %v731
    %v978 = vadd.f32 %v962, %v736
    %v979 = vadd.f32 %v963, %v736
    %v980 = vadd.f32 %v964, %v741
    %v981 = vadd.f32 %v965, %v741
    %v982 = vadd.f32 %v966, %v746
    %v983 = vadd.f32 %v967, %v746
    %v984 = vadd.f32 %v968, %v751
    %v985 = vadd.f32 %v969, %v751
    %v986 = vadd.f32 %v970, %v756
    %v987 = vadd.f32 %v971, %v756
    %v988 = vadd.f32 %v972, %v761
    %v989 = vadd.f32 %v973, %v761
    %v990 = vadd.f32 %v974, %v766
    %v991 = vadd.f32 %v975, %v766
    %v992 = vmul.f32 %v976, 0.5
    %v993 = vmul.f32 %v977, 0.5
    %v994 = vmul.f32 %v978, 0.5
    %v995 = vmul.f32 %v979, 0.5
    %v996 = vmul.f32 %v980, 0.5
    %v997 = vmul.f32 %v981, 0.5
    %v998 = vmul.f32 %v982, 0.5
    %v999 = vmul.f32 %v983, 0.5
    %v1000 = vmul.f32 %v984, 0.5
    %v1001 = vmul.f32 %v985, 0.5
    %v1002 = vmul.f32 %v986, 0.5
    %v1003 = vmul.f32 %v987, 0.5
    %v1004 = vmul.f32 %v988, 0.5
    %v1005 = vmul.f32 %v989, 0.5
    %v1006 = vmul.f32 %v990, 0.5
    %v1007 = vmul.f32 %v991, 0.5
    %v1008 = vmul.f32 %v976, %v976
    %v1009 = vmul.f32 %v977, %v977
    %v1010 = vmul.f32 %v978, %v978
    %v1011 = vmul.f32 %v979, %v979
    %v1012 = vmul.f32 %v980, %v980
    %v1013 = vmul.f32 %v981, %v981
    %v1014 = vmul.f32 %v982, %v982
    %v1015 = vmul.f32 %v983, %v983
    %v1016 = vmul.f32 %v984, %v984
    %v1017 = vmul.f32 %v985, %v985
    %v1018 = vmul.f32 %v986, %v986
    %v1019 = vmul.f32 %v987, %v987
    %v1020 = vmul.f32 %v988, %v988
    %v1021 = vmul.f32 %v989, %v989
    %v1022 = vmul.f32 %v990, %v990
    %v1023 = vmul.f32 %v991, %v991
    %v1024 = vmul.f32 %v1008, %v976
    %v1025 = vmul.f32 %v1009, %v977
    %v1026 = vmul.f32 %v1010, %v978
    %v1027 = vmul.f32 %v1011, %v979
    %v1028 = vmul.f32 %v1012, %v980
    %v1029 = vmul.f32 %v1013, %v981
    %v1030 = vmul.f32 %v1014, %v982
    %v1031 = vmul.f32 %v1015, %v983
    %v1032 = vmul.f32 %v1016, %v984
    %v1033 = vmul.f32 %v1017, %v985
    %v1034 = vmul.f32 %v1018, %v986
    %v1035 = vmul.f32 %v1019, %v987
    %v1036 = vmul.f32 %v1020, %v988
    %v1037 = vmul.f32 %v1021, %v989
    %v1038 = vmul.f32 %v1022, %v990
    %v1039 = vmul.f32 %v1023, %v991
    %v1040 = vmul.f32 %v1024, 0.044715
    %v1041 = vmul.f32 %v1025, 0.044715
    %v1042 = vmul.f32 %v1026, 0.044715
    %v1043 = vmul.f32 %v1027, 0.044715
    %v1044 = vmul.f32 %v1028, 0.044715
    %v1045 = vmul.f32 %v1029, 0.044715
    %v1046 = vmul.f32 %v1030, 0.044715
    %v1047 = vmul.f32 %v1031, 0.044715
    %v1048 = vmul.f32 %v1032, 0.044715
    %v1049 = vmul.f32 %v1033, 0.044715
    %v1050 = vmul.f32 %v1034, 0.044715
    %v1051 = vmul.f32 %v1035, 0.044715
    %v1052 = vmul.f32 %v1036, 0.044715
    %v1053 = vmul.f32 %v1037, 0.044715
    %v1054 = vmul.f32 %v1038, 0.044715
    %v1055 = vmul.f32 %v1039, 0.044715
    %v1056 = vadd.f32 %v976, %v1040
    %v1057 = vadd.f32 %v977, %v1041
    %v1058 = vadd.f32 %v978, %v1042
    %v1059 = vadd.f32 %v979, %v1043
    %v1060 = vadd.f32 %v980, %v1044
    %v1061 = vadd.f32 %v981, %v1045
    %v1062 = vadd.f32 %v982, %v1046
    %v1063 = vadd.f32 %v983, %v1047
    %v1064 = vadd.f32 %v984, %v1048
    %v1065 = vadd.f32 %v985, %v1049
    %v1066 = vadd.f32 %v986, %v1050
    %v1067 = vadd.f32 %v987, %v1051
    %v1068 = vadd.f32 %v988, %v1052
    %v1069 = vadd.f32 %v989, %v1053
    %v1070 = vadd.f32 %v990, %v1054
    %v1071 = vadd.f32 %v991, %v1055
    %v1072 = vmul.f32 %v1056, 0.7978846
    %v1073 = vmul.f32 %v1057, 0.7978846
    %v1074 = vmul.f32 %v1058, 0.7978846
    %v1075 = vmul.f32 %v1059, 0.7978846
    %v1076 = vmul.f32 %v1060, 0.7978846
    %v1077 = vmul.f32 %v1061, 0.7978846
    %v1078 = vmul.f32 %v1062, 0.7978846
    %v1079 = vmul.f32 %v1063, 0.7978846
    %v1080 = vmul.f32 %v1064, 0.7978846
    %v1081 = vmul.f32 %v1065, 0.7978846
    %v1082 = vmul.f32 %v1066, 0.7978846
    %v1083 = vmul.f32 %v1067, 0.7978846
    %v1084 = vmul.f32 %v1068, 0.7978846
    %v1085 = vmul.f32 %v1069, 0.7978846
    %v1086 = vmul.f32 %v1070, 0.7978846
    %v1087 = vmul.f32 %v1071, 0.7978846
    %v1088 = vtanh.pop %v1072
    %v1089 = vtanh.pop %v1073
    %v1090 = vtanh.pop %v1074
    %v1091 = vtanh.pop %v1075
    %v1092 = vtanh.pop %v1076
    %v1093 = vtanh.pop %v1077
    %v1094 = vtanh.pop %v1078
    %v1095 = vtanh.pop %v1079
    %v1096 = vtanh.pop %v1080
    %v1097 = vtanh.pop %v1081
    %v1098 = vtanh.pop %v1082
    %v1099 = vtanh.pop %v1083
    %v1100 = vtanh.pop %v1084
    %v1101 = vtanh.pop %v1085
    %v1102 = vtanh.pop %v1086
    %v1103 = vtanh.pop %v1087
    %v1104 = vadd.f32 %v1088, 1.0
    %v1105 = vadd.f32 %v1089, 1.0
    %v1106 = vadd.f32 %v1090, 1.0
    %v1107 = vadd.f32 %v1091, 1.0
    %v1108 = vadd.f32 %v1092, 1.0
    %v1109 = vadd.f32 %v1093, 1.0
    %v1110 = vadd.f32 %v1094, 1.0
    %v1111 = vadd.f32 %v1095, 1.0
    %v1112 = vadd.f32 %v1096, 1.0
    %v1113 = vadd.f32 %v1097, 1.0
    %v1114 = vadd.f32 %v1098, 1.0
    %v1115 = vadd.f32 %v1099, 1.0
    %v1116 = vadd.f32 %v1100, 1.0
    %v1117 = vadd.f32 %v1101, 1.0
    %v1118 = vadd.f32 %v1102, 1.0
    %v1119 = vadd.f32 %v1103, 1.0
    %v1120 = vmul.f32 %v992, %v1104
    %v1121 = vmul.f32 %v993, %v1105
    %v1122 = vmul.f32 %v994, %v1106
    %v1123 = vmul.f32 %v995, %v1107
    %v1124 = vmul.f32 %v996, %v1108
    %v1125 = vmul.f32 %v997, %v1109
    %v1126 = vmul.f32 %v998, %v1110
    %v1127 = vmul.f32 %v999, %v1111
    %v1128 = vmul.f32 %v1000, %v1112
    %v1129 = vmul.f32 %v1001, %v1113
    %v1130 = vmul.f32 %v1002, %v1114
    %v1131 = vmul.f32 %v1003, %v1115
    %v1132 = vmul.f32 %v1004, %v1116
    %v1133 = vmul.f32 %v1005, %v1117
    %v1134 = vmul.f32 %v1006, %v1118
    %v1135 = vmul.f32 %v1007, %v1119
    %1136 = vst [vmem:[%s319] sm:$0xff] %v1120
    %1137 = vst [vmem:[%s319 + $0x8] sm:$0xff] %v1121
    %1138 = vst [vmem:[%s319 + $0x10] sm:$0xff] %v1122
    %1139 = vst [vmem:[%s319 + $0x18] sm:$0xff] %v1123
    %1140 = vst [vmem:[%s319 + $0x20] sm:$0xff] %v1124
    %1141 = vst [vmem:[%s319 + $0x28] sm:$0xff] %v1125
    %1142 = vst [vmem:[%s319 + $0x30] sm:$0xff] %v1126
    %1143 = vst [vmem:[%s319 + $0x38] sm:$0xff] %v1127
    %1144 = vst [vmem:[%s319 + $0x40] sm:$0xff] %v1128
    %1145 = vst [vmem:[%s319 + $0x48] sm:$0xff] %v1129
    %1146 = vst [vmem:[%s319 + $0x50] sm:$0xff] %v1130
    %1147 = vst [vmem:[%s319 + $0x58] sm:$0xff] %v1131
    %1148 = vst [vmem:[%s319 + $0x60] sm:$0xff] %v1132
    %1149 = vst [vmem:[%s319 + $0x68] sm:$0xff] %v1133
    %1150 = vst [vmem:[%s319 + $0x70] sm:$0xff] %v1134
    %1151 = vst [vmem:[%s319 + $0x78] sm:$0xff] %v1135
    // Predicated region
    $region22: #{tpu_custom_call.1} parent=1 // pred_check
      _
    $region23: #{tpu_custom_call.1} parent=1 // pred_check_branch
      %1153 = sbr.rel (0) target = $region25
    $region24: #{tpu_custom_call.1} parent=1 // pred_region
      %1155 = vsyncadd [#allocation3], 0
      %s1156 = sshll.u32 [#allocation2], 4
      %s1157 = int_to_ptr.vmem [resolvable:$true] %s1156
      %s1158 = sshll.u32 %s5, 4
      %s1159 = int_to_ptr.hbm [resolvable:$true] %s1158
      %1164 = dma.vmem_to_hbm [thread:$0]  %s1157, 4096, %s1159, [#allocation3], 256, 256, 16
    $region25: #{tpu_custom_call.1} parent=1 // pred_fallthru
      _
    // Predicated region
    $region26: #{tpu_custom_call.1} parent=1 // pred_check
      _
    $region27: #{tpu_custom_call.1} parent=1 // pred_check_branch
      %1166 = sbr.rel (0) target = $region29
    $region28: #{tpu_custom_call.1} parent=1 // pred_region
      %1168 = dma.done [#allocation3], 4096
    $region29: #{tpu_custom_call.1} parent=1 // pred_fallthru
      _
    %1169 = vsyncpa [#allocation3], 1

</llo_original>
